<compile_context>
chip_gen: v7x
topology: tpu7x:2x2x1
jax: 0.10.0
libtpu: 0.0.40
codegen_flags: <defaults>
</compile_context>

<pallas_src>
import functools

import jax
import jax.numpy as jnp
from jax.experimental import pallas as pl
from jax.experimental.pallas import tpu as pltpu

_LANE = 128            # TPU vreg lane width
_MIB = 1024 * 1024


def _round_down(x, m):
    return (x // m) * m


def _round_up(x, m):
    return -(-x // m) * m


def _vmem_limit_bytes():
    """Generation-aware scoped-VMEM request: ~0.75 of physical, capped at 64 MiB.

    -> 48 MiB on v7x (64 MiB physical), 64 MiB on v5e/v6e (128 MiB physical).
    """
    phys = 128 * _MIB
    try:
        info = pltpu.get_tpu_info()
        phys = int(getattr(info, "vmem_capacity_bytes", phys))
    except Exception:
        pass
    return min((3 * phys) // 4, 64 * _MIB)


# --------------------------------------------------------------------------------------
# Path 1: full-batch column slab, 1-D grid over feature tiles (small / moderate N).
# --------------------------------------------------------------------------------------
def _bn1d_full_batch_kernel(x_ref, w_ref, b_ref, o_ref, mean_ref, var_ref, *, eps, inv_n):
    # x_ref/o_ref: (N, TILE_C); w_ref/b_ref/mean_ref/var_ref: (1, TILE_C)
    x = x_ref[...].astype(jnp.float32)

    # Shifted single-pass stats (pivot = row 0): variance is shift-invariant, and the
    # shift keeps E[d^2] - mean_d^2 well conditioned when |mean| >> std.
    piv = x[0:1, :]
    d = x - piv
    mean_d = jnp.sum(d, axis=0, keepdims=True) * inv_n
    var = jnp.maximum(jnp.sum(d * d, axis=0, keepdims=True) * inv_n - mean_d * mean_d, 0.0)
    inv_std = jax.lax.rsqrt(var + eps)

    # Fold the affine transform: y = d * scale + shift  (mean folded into shift).
    scale = inv_std * w_ref[...].astype(jnp.float32)
    shift = b_ref[...].astype(jnp.float32) - mean_d * scale
    o_ref[...] = (d * scale + shift).astype(o_ref.dtype)

    mean_ref[...] = mean_d + piv        # batch mean (for running-stat update)
    var_ref[...] = var                  # biased batch variance


# --------------------------------------------------------------------------------------
# Path 2: large N -> two-phase N-tiled grid (C_tiles, 2, N_tiles).
#   phase 0: accumulate shifted sum / sumsq in VMEM scratch (masked for ragged last N tile)
#   phase 1: compute scale/shift once, then normalize each N tile.
# Output block index is pinned to (0, j) during phase 0, so the pipeline never writes
# back a garbage block (each output block is written back exactly once, with real data).
# --------------------------------------------------------------------------------------
def _bn1d_two_phase_kernel(x_ref, w_ref, b_ref, o_ref, mean_ref, var_ref,
                           sum_sc, sq_sc, piv_sc, scale_sc, shift_sc,
                           *, eps, inv_n, n_valid, n_tile):
    phase = pl.program_id(1)
    ni = pl.program_id(2)

    x = x_ref[...].astype(jnp.float32)

    @pl.when(phase == 0)
    def _accumulate():
        @pl.when(ni == 0)
        def _init():
            piv_sc[...] = x[0:1, :]                 # pivot = first (valid) batch row
            sum_sc[...] = jnp.zeros_like(sum_sc)
            sq_sc[...] = jnp.zeros_like(sq_sc)

        d = x - piv_sc[...]
        # Mask rows beyond the true batch size (ragged last N tile) so they don't
        # contaminate the reduction over N.
        row = jax.lax.broadcasted_iota(jnp.int32, d.shape, 0) + ni * n_tile
        d = jnp.where(row < n_valid, d, 0.0)
        sum_sc[...] = sum_sc[...] + jnp.sum(d, axis=0, keepdims=True)
        sq_sc[...] = sq_sc[...] + jnp.sum(d * d, axis=0, keepdims=True)

    @pl.when(phase == 1)
    def _normalize():
        @pl.when(ni == 0)
        def _finalize_stats():
            mean_d = sum_sc[...] * inv_n
            var = jnp.maximum(sq_sc[...] * inv_n - mean_d * mean_d, 0.0)
            inv_std = jax.lax.rsqrt(var + eps)
            scale = inv_std * w_ref[...].astype(jnp.float32)
            scale_sc[...] = scale
            shift_sc[...] = b_ref[...].astype(jnp.float32) - mean_d * scale
            mean_ref[...] = mean_d + piv_sc[...]
            var_ref[...] = var

        d = x - piv_sc[...]
        o_ref[...] = (d * scale_sc[...] + shift_sc[...]).astype(o_ref.dtype)


# --------------------------------------------------------------------------------------
# Wrapper
# --------------------------------------------------------------------------------------
def meta_batch_norm1d(x, weight, bias, eps=1e-5, *,
                      running_mean=None, running_var=None, momentum=0.1,
                      tile_c=None, n_tile=None, force_2d=False):
    """Forward of MetaBatchNorm1d in training mode (batch statistics).

    x: (N, C), weight/bias: (C,).
    Returns the normalized output. If `running_mean` / `running_var` are provided,
    also returns their EMA-updated values (PyTorch updates with the *unbiased* var).
    """
    if x.ndim != 2:
        # TODO(synk): 3-D (N, C, L) BatchNorm1d input (per-channel stats over N*L) not implemented.
        raise ValueError("expected 2D input (N, C)")
    n, c = x.shape
    itemsize = jnp.dtype(x.dtype).itemsize
    c_lanes = _round_up(c, _LANE)
    sub = 16 if itemsize < 4 else 8          # sublane granularity (packed dtypes pack 2x)

    vmem_limit = _vmem_limit_bytes()
    # Two double-buffered (N-tile, C-tile) slabs (x in + out) live at once; keep each
    # slab at <= ~1/5 of the requested VMEM window.
    slab_budget = max(vmem_limit // 5, _MIB)

    def _half_cap(tc):
        # Prefer >=2 feature tiles so the "parallel" C axis can feed both v7x TensorCores.
        if c_lanes >= 2 * _LANE:
            tc = min(tc, _round_up(c_lanes // 2, _LANE))
        return max(_LANE, tc)

    if force_2d:
        use_1d = False
    else:
        auto_tc = _round_down(slab_budget // max(n * itemsize, 1), _LANE)
        # Use the simple full-batch path while a reasonably wide column slab still fits.
        use_1d = auto_tc >= min(4 * _LANE, c_lanes)

    if use_1d:
        tc = (_round_down(slab_budget // (n * itemsize), _LANE) if tile_c is None
              else _round_down(int(tile_c), _LANE))
        tc = _half_cap(min(max(tc, _LANE), c_lanes))
        grid_c = pl.cdiv(c, tc)
        nt = n
        grid_n = 1
    else:
        tc = (min(c_lanes, 8 * _LANE) if tile_c is None
              else min(max(_round_down(int(tile_c), _LANE), _LANE), c_lanes))
        tc = _half_cap(tc)
        nt = (_round_down(slab_budget // (tc * itemsize), sub) if n_tile is None
              else _round_down(int(n_tile), sub))
        nt = max(sub, min(nt, _round_up(n, sub)))
        grid_c = pl.cdiv(c, tc)
        grid_n = pl.cdiv(n, nt)

    # Only the tiny (1, C) params are padded (so their tiles are never ragged); x and the
    # output stay unpadded -- ragged last tiles are handled by Pallas (masked writes).
    c_param = grid_c * tc
    w2 = weight.reshape(1, c)
    b2 = bias.reshape(1, c)
    if c_param != c:
        w2 = jnp.pad(w2, ((0, 0), (0, c_param - c)), constant_values=1.0)
        b2 = jnp.pad(b2, ((0, 0), (0, c_param - c)))

    out_shapes = (jax.ShapeDtypeStruct((n, c), x.dtype),
                  jax.ShapeDtypeStruct((1, c), jnp.float32),
                  jax.ShapeDtypeStruct((1, c), jnp.float32))

    if use_1d:
        kernel = functools.partial(_bn1d_full_batch_kernel,
                                   eps=float(eps), inv_n=1.0 / float(n))
        out, bmean, bvar = pl.pallas_call(
            kernel,
            out_shape=out_shapes,
            grid_spec=pl.GridSpec(
                grid=(grid_c,),
                in_specs=[
                    pl.BlockSpec((n, tc), lambda j: (0, j)),
                    pl.BlockSpec((1, tc), lambda j: (0, j)),
                    pl.BlockSpec((1, tc), lambda j: (0, j)),
                ],
                out_specs=(
                    pl.BlockSpec((n, tc), lambda j: (0, j)),
                    pl.BlockSpec((1, tc), lambda j: (0, j)),
                    pl.BlockSpec((1, tc), lambda j: (0, j)),
                ),
            ),
            compiler_params=pltpu.CompilerParams(
                dimension_semantics=("parallel",),
                vmem_limit_bytes=vmem_limit,
            ),
        )(x, w2, b2)
    else:
        kernel = functools.partial(_bn1d_two_phase_kernel,
                                   eps=float(eps), inv_n=1.0 / float(n),
                                   n_valid=n, n_tile=nt)
        out, bmean, bvar = pl.pallas_call(
            kernel,
            out_shape=out_shapes,
            grid_spec=pltpu.PrefetchScalarGridSpec(
                num_scalar_prefetch=0,
                grid=(grid_c, 2, grid_n),
                in_specs=[
                    pl.BlockSpec((nt, tc), lambda j, p, i: (i, j)),
                    pl.BlockSpec((1, tc), lambda j, p, i: (0, j)),
                    pl.BlockSpec((1, tc), lambda j, p, i: (0, j)),
                ],
                out_specs=(
                    # Pinned to block 0 during phase 0 (p == 0) so only real data is
                    # ever written back; each (i, j) block is written exactly once.
                    pl.BlockSpec((nt, tc), lambda j, p, i: (i * p, j)),
                    pl.BlockSpec((1, tc), lambda j, p, i: (0, j)),
                    pl.BlockSpec((1, tc), lambda j, p, i: (0, j)),
                ),
                scratch_shapes=[pltpu.VMEM((1, tc), jnp.float32) for _ in range(5)],
            ),
            compiler_params=pltpu.CompilerParams(
                dimension_semantics=("parallel", "arbitrary", "arbitrary"),
                vmem_limit_bytes=vmem_limit,
            ),
        )(x, w2, b2)

    if running_mean is None or running_var is None:
        return out

    # Running-stat EMA (PyTorch: unbiased variance for the running buffer).
    # TODO(synk): momentum=None (cumulative average via num_batches_tracked) not implemented.
    m = 0.1 if momentum is None else float(momentum)
    unbias = float(n) / float(n - 1) if n > 1 else 1.0
    new_mean = (1.0 - m) * running_mean + m * bmean[0].astype(running_mean.dtype)
    new_var = (1.0 - m) * running_var + m * (unbias * bvar[0]).astype(running_var.dtype)
    return out, new_mean, new_var


if __name__ == "__main__":
    key = jax.random.PRNGKey(0)
    k1, k2, k3, k4 = jax.random.split(key, 4)
    eps = 1e-5
    momentum = 0.1

    def ref_forward(x, w, b, rm, rv):
        n = x.shape[0]
        mean = jnp.mean(x, axis=0)
        var_b = jnp.mean((x - mean[None, :]) ** 2, axis=0)
        y = (x - mean[None, :]) / jnp.sqrt(var_b[None, :] + eps) * w[None, :] + b[None, :]
        var_u = var_b * n / (n - 1)
        return (y,
                (1.0 - momentum) * rm + momentum * mean,
                (1.0 - momentum) * rv + momentum * var_u)

    # Case 1: small batch -> full-batch column-slab (1-D) path; C=32 exercises the
    # unpadded ragged feature tile; the +5 offset exercises the shifted statistics.
    N1, C1 = 8, 32
    x1 = jax.random.normal(k1, (N1, C1), jnp.float32) * 2.0 + 5.0
    w1 = jax.random.uniform(k2, (C1,), jnp.float32)     # reset_parameters: weight ~ U[0,1)
    b1 = jnp.zeros((C1,), jnp.float32)                  # bias = 0
    rm1 = jnp.zeros((C1,), jnp.float32)
    rv1 = jnp.ones((C1,), jnp.float32)
    o1, nm1, nv1 = meta_batch_norm1d(x1, w1, b1, eps=eps,
                                     running_mean=rm1, running_var=rv1, momentum=momentum)
    jax.block_until_ready((o1, nm1, nv1))
    r1, rrm1, rrv1 = ref_forward(x1, w1, b1, rm1, rv1)
    assert jnp.allclose(o1, r1, atol=1e-4, rtol=1e-4), "1-D path output mismatch"
    assert jnp.allclose(nm1, rrm1, atol=1e-4, rtol=1e-4), "1-D path running_mean mismatch"
    assert jnp.allclose(nv1, rrv1, atol=1e-4, rtol=1e-4), "1-D path running_var mismatch"

    # Case 2: force the large-N two-phase (N-tiled) path at small shapes, with ragged
    # last tiles on both the batch axis (28 % 8 != 0) and feature axis (200 % 128 != 0).
    N2, C2 = 28, 200
    x2 = jax.random.normal(k3, (N2, C2), jnp.float32) - 3.0
    w2 = jax.random.uniform(k4, (C2,), jnp.float32) + 0.5
    b2 = jnp.full((C2,), 0.25, jnp.float32)
    rm2 = jnp.zeros((C2,), jnp.float32)
    rv2 = jnp.ones((C2,), jnp.float32)
    o2, nm2, nv2 = meta_batch_norm1d(x2, w2, b2, eps=eps,
                                     running_mean=rm2, running_var=rv2, momentum=momentum,
                                     force_2d=True, tile_c=128, n_tile=8)
    jax.block_until_ready((o2, nm2, nv2))
    r2, rrm2, rrv2 = ref_forward(x2, w2, b2, rm2, rv2)
    assert jnp.allclose(o2, r2, atol=1e-4, rtol=1e-4), "2-D path output mismatch"
    assert jnp.allclose(nm2, rrm2, atol=1e-4, rtol=1e-4), "2-D path running_mean mismatch"
    assert jnp.allclose(nv2, rrv2, atol=1e-4, rtol=1e-4), "2-D path running_var mismatch"

    print("KERNEL_OK")
</pallas_src>

<mosaic_0001>
module attributes {stable_mosaic.version = 11 : i64} {
  func.func @_bn1d_full_batch_kernel(%arg0: i32, %arg1: memref<8x128xf32, #tpu.memory_space<vmem>>, %arg2: memref<1x128xf32, #tpu.memory_space<vmem>>, %arg3: memref<1x128xf32, #tpu.memory_space<vmem>>, %arg4: memref<8x128xf32, #tpu.memory_space<vmem>>, %arg5: memref<1x128xf32, #tpu.memory_space<vmem>>, %arg6: memref<1x128xf32, #tpu.memory_space<vmem>>) attributes {dimension_semantics = [#tpu.dimension_semantics<parallel>], iteration_bounds = array<i64: 1>, scalar_prefetch = 0 : i64, scratch_operands = 0 : i64, tpu.core_type = #tpu.core_type<tc>, window_params = [{transform_indices = @transform_0, window_bounds = array<i64: 8, 128>}, {transform_indices = @transform_1, window_bounds = array<i64: 1, 128>}, {transform_indices = @transform_2, window_bounds = array<i64: 1, 128>}, {transform_indices = @transform_3, window_bounds = array<i64: 8, 128>}, {transform_indices = @transform_4, window_bounds = array<i64: 1, 128>}, {transform_indices = @transform_5, window_bounds = array<i64: 1, 128>}]} {
    %c0 = arith.constant 0 : index
    %c0_0 = arith.constant 0 : index
    %0 = vector.load %arg1[%c0, %c0_0] : memref<8x128xf32, #tpu.memory_space<vmem>>, vector<8x128xf32>
    %1 = vector.extract_strided_slice %0 {offsets = [0, 0], sizes = [1, 128], strides = [1, 1]} : vector<8x128xf32> to vector<1x128xf32>
    %2 = vector.broadcast %1 : vector<1x128xf32> to vector<8x128xf32>
    %3 = arith.subf %0, %2 : vector<8x128xf32>
    %cst = arith.constant dense<0.000000e+00> : vector<128xf32>
    %4 = vector.multi_reduction <add>, %3, %cst [0] : vector<8x128xf32> to vector<128xf32>
    %5 = vector.shape_cast %4 : vector<128xf32> to vector<1x128xf32>
    %cst_1 = arith.constant 1.250000e-01 : f32
    %6 = vector.broadcast %cst_1 : f32 to vector<1x128xf32>
    %7 = arith.mulf %5, %6 : vector<1x128xf32>
    %8 = arith.mulf %3, %3 : vector<8x128xf32>
    %cst_2 = arith.constant dense<0.000000e+00> : vector<128xf32>
    %9 = vector.multi_reduction <add>, %8, %cst_2 [0] : vector<8x128xf32> to vector<128xf32>
    %10 = vector.shape_cast %9 : vector<128xf32> to vector<1x128xf32>
    %cst_3 = arith.constant 1.250000e-01 : f32
    %11 = vector.broadcast %cst_3 : f32 to vector<1x128xf32>
    %12 = arith.mulf %10, %11 : vector<1x128xf32>
    %13 = arith.mulf %7, %7 : vector<1x128xf32>
    %14 = arith.subf %12, %13 : vector<1x128xf32>
    %cst_4 = arith.constant 0.000000e+00 : f32
    %15 = vector.broadcast %cst_4 : f32 to vector<1x128xf32>
    %16 = arith.maximumf %14, %15 : vector<1x128xf32>
    %cst_5 = arith.constant 9.99999974E-6 : f32
    %17 = vector.broadcast %cst_5 : f32 to vector<1x128xf32>
    %18 = arith.addf %16, %17 : vector<1x128xf32>
    %19 = math.rsqrt %18 : vector<1x128xf32>
    %c0_6 = arith.constant 0 : index
    %c0_7 = arith.constant 0 : index
    %20 = vector.load %arg2[%c0_6, %c0_7] : memref<1x128xf32, #tpu.memory_space<vmem>>, vector<1x128xf32>
    %21 = arith.mulf %19, %20 : vector<1x128xf32>
    %c0_8 = arith.constant 0 : index
    %c0_9 = arith.constant 0 : index
    %22 = vector.load %arg3[%c0_8, %c0_9] : memref<1x128xf32, #tpu.memory_space<vmem>>, vector<1x128xf32>
    %23 = arith.mulf %7, %21 : vector<1x128xf32>
    %24 = arith.subf %22, %23 : vector<1x128xf32>
    %25 = vector.broadcast %21 : vector<1x128xf32> to vector<8x128xf32>
    %26 = arith.mulf %3, %25 : vector<8x128xf32>
    %27 = vector.broadcast %24 : vector<1x128xf32> to vector<8x128xf32>
    %28 = arith.addf %26, %27 : vector<8x128xf32>
    %c0_10 = arith.constant 0 : index
    %c0_11 = arith.constant 0 : index
    %29 = vector.load %arg4[%c0_10, %c0_11] : memref<8x128xf32, #tpu.memory_space<vmem>>, vector<8x128xf32>
    tpu.vector_store %arg4[%c0_10, %c0_11], %28 {strides = array<i32>} : memref<8x128xf32, #tpu.memory_space<vmem>>, vector<8x128xf32>,
    %30 = arith.addf %7, %1 : vector<1x128xf32>
    %c0_12 = arith.constant 0 : index
    %c0_13 = arith.constant 0 : index
    %31 = vector.load %arg5[%c0_12, %c0_13] : memref<1x128xf32, #tpu.memory_space<vmem>>, vector<1x128xf32>
    tpu.vector_store %arg5[%c0_12, %c0_13], %30 {strides = array<i32>} : memref<1x128xf32, #tpu.memory_space<vmem>>, vector<1x128xf32>,
    %c0_14 = arith.constant 0 : index
    %c0_15 = arith.constant 0 : index
    %32 = vector.load %arg6[%c0_14, %c0_15] : memref<1x128xf32, #tpu.memory_space<vmem>>, vector<1x128xf32>
    tpu.vector_store %arg6[%c0_14, %c0_15], %16 {strides = array<i32>} : memref<1x128xf32, #tpu.memory_space<vmem>>, vector<1x128xf32>,
    return
  }
  func.func @transform_0(%arg0: i32) -> (i32, i32) {
    %c0_i32 = arith.constant 0 : i32
    %c0_i32_0 = arith.constant 0 : i32
    return %c0_i32, %arg0 : i32, i32
  }
  func.func @transform_1(%arg0: i32) -> (i32, i32) {
    %c0_i32 = arith.constant 0 : i32
    %c0_i32_0 = arith.constant 0 : i32
    return %c0_i32, %arg0 : i32, i32
  }
  func.func @transform_2(%arg0: i32) -> (i32, i32) {
    %c0_i32 = arith.constant 0 : i32
    %c0_i32_0 = arith.constant 0 : i32
    return %c0_i32, %arg0 : i32, i32
  }
  func.func @transform_3(%arg0: i32) -> (i32, i32) {
    %c0_i32 = arith.constant 0 : i32
    %c0_i32_0 = arith.constant 0 : i32
    return %c0_i32, %arg0 : i32, i32
  }
  func.func @transform_4(%arg0: i32) -> (i32, i32) {
    %c0_i32 = arith.constant 0 : i32
    %c0_i32_0 = arith.constant 0 : i32
    return %c0_i32, %arg0 : i32, i32
  }
  func.func @transform_5(%arg0: i32) -> (i32, i32) {
    %c0_i32 = arith.constant 0 : i32
    %c0_i32_0 = arith.constant 0 : i32
    return %c0_i32, %arg0 : i32, i32
  }
}

</mosaic_0001>

<llo_original>
// kernel: tpu_custom_call.1
$region0: #{tpu_custom_call.1}
  #allocation0 [shape = 'u32[]', space=smem, size = 0x4, offset = 0x4, fixed_abs, tag = 'smem constant byte address 0x4 - core index']
  #allocation1 [shape = 'u32[144,128]{1,0:T(1,128)}', space=vmem, size = 0x12000, scoped, tag = 'internal scratch']
  %s0 = inlined_call_operand.hbm [shape: f32[8,32], index: 0, kind: input, shape index: {}]
  %s1 = inlined_call_operand.hbm [shape: f32[1,128], index: 1, kind: input, shape index: {}]
  %s2 = inlined_call_operand.hbm [shape: f32[1,128], index: 2, kind: input, shape index: {}]
  %s3 = inlined_call_operand.hbm [shape: f32[8,32], index: 3, kind: output, shape index: {0}]
  %s4 = inlined_call_operand.hbm [shape: f32[1,32], index: 4, kind: output, shape index: {1}]
  %s5 = inlined_call_operand.hbm [shape: f32[1,32], index: 5, kind: output, shape index: {2}]
  %6 = xla_tuple %s3, %s4, %s5
  %s7 = sld [smem:[#allocation0]]
  $region50: #{tpu_custom_call.1} parent=0
    _
  %s9 = ssub.s32 1, %s7
  %s10 = scalar_select 0, %s9, %s7
  $region1: #{tpu_custom_call.1} parent=0
    #allocation2 [shape = 'u8[4096]{0}', space=vmem, size = 0x1000, scoped, tag = 'input window, operand 0, single buffered']
    #allocation3 [shape = 's32[1]{0}', space=sflag, size = 0x4, scoped, tag = 'scoped memory for tpu_custom_call.1']
    #allocation4 [shape = 's32[1]{0}', space=sflag, size = 0x4, scoped, tag = 'scoped memory for tpu_custom_call.1']
    #allocation5 [shape = 'u8[512]{0}', space=vmem, size = 0x400, scoped, tag = 'input window, operand 1, single buffered']
    #allocation6 [shape = 's32[1]{0}', space=sflag, size = 0x4, scoped, tag = 'scoped memory for tpu_custom_call.1']
    #allocation7 [shape = 'u8[512]{0}', space=vmem, size = 0x400, scoped, tag = 'input window, operand 2, single buffered']
    #allocation8 [shape = 'u8[4096]{0}', space=vmem, size = 0x1000, scoped, tag = 'output window, operand 0, single buffered']
    #allocation9 [shape = 'u8[512]{0}', space=vmem, size = 0x400, scoped, tag = 'output window, operand 1, single buffered']
    #allocation10 [shape = 's32[1]{0}', space=sflag, size = 0x4, scoped, tag = 'scoped memory for tpu_custom_call.1']
    #allocation11 [shape = 'u8[512]{0}', space=vmem, size = 0x400, scoped, tag = 'output window, operand 2, single buffered']
    %11 = vsyncpa [#allocation3], 0
    %12 = vsyncpa [#allocation6], 0
    %13 = vsyncpa [#allocation4], 0
    %14 = vsyncpa [#allocation10], 0
    // Predicated region
    $region2: #{tpu_custom_call.1} parent=1 // pred_check
      _
    $region3: #{tpu_custom_call.1} parent=1 // pred_check_branch
      %16 = sbr.rel (0) target = $region5
    $region4: #{tpu_custom_call.1} parent=1 // pred_region
      %s18 = ssub.s32 128, 128
      %19 = vsyncadd [#allocation3], %s18
      %s21 = sshll.u32 [#allocation2], 4
      %s22 = int_to_ptr.vmem [resolvable:$true] %s21
      %24 = dma.hbm_to_vmem [thread:$0]  %s0, 128, %s22, [#allocation3]
    $region5: #{tpu_custom_call.1} parent=1 // pred_fallthru
      _
    // Predicated region
    $region6: #{tpu_custom_call.1} parent=1 // pred_check
      _
    $region7: #{tpu_custom_call.1} parent=1 // pred_check_branch
      %26 = sbr.rel (0) target = $region9
    $region8: #{tpu_custom_call.1} parent=1 // pred_region
      %s28 = ssub.s32 16, 16
      %29 = vsyncadd [#allocation6], %s28
      %s31 = sshll.u32 [#allocation5], 4
      %s32 = int_to_ptr.vmem [resolvable:$true] %s31
      %34 = dma.hbm_to_vmem [thread:$0]  %s1, 16, %s32, [#allocation6]
    $region9: #{tpu_custom_call.1} parent=1 // pred_fallthru
      _
    // Predicated region
    $region10: #{tpu_custom_call.1} parent=1 // pred_check
      _
    $region11: #{tpu_custom_call.1} parent=1 // pred_check_branch
      %36 = sbr.rel (0) target = $region13
    $region12: #{tpu_custom_call.1} parent=1 // pred_region
      %s38 = ssub.s32 16, 16
      %39 = vsyncadd [#allocation6], %s38
      %s41 = sshll.u32 [#allocation7], 4
      %s42 = int_to_ptr.vmem [resolvable:$true] %s41
      %44 = dma.hbm_to_vmem [thread:$0]  %s2, 16, %s42, [#allocation6]
    $region13: #{tpu_custom_call.1} parent=1 // pred_fallthru
      _
    // Predicated region
    $region14: #{tpu_custom_call.1} parent=1 // pred_check
      _
    $region15: #{tpu_custom_call.1} parent=1 // pred_check_branch
      %46 = sbr.rel (0) target = $region17
    $region16: #{tpu_custom_call.1} parent=1 // pred_region
      %47 = dma.done [#allocation3], 128
    $region17: #{tpu_custom_call.1} parent=1 // pred_fallthru
      _
    // Predicated region
    $region18: #{tpu_custom_call.1} parent=1 // pred_check
      _
    $region19: #{tpu_custom_call.1} parent=1 // pred_check_branch
      %49 = sbr.rel (0) target = $region21
    $region20: #{tpu_custom_call.1} parent=1 // pred_region
      %50 = dma.done [#allocation6], 16
    $region21: #{tpu_custom_call.1} parent=1 // pred_fallthru
      _
    // Predicated region
    $region22: #{tpu_custom_call.1} parent=1 // pred_check
      _
    $region23: #{tpu_custom_call.1} parent=1 // pred_check_branch
      %52 = sbr.rel (0) target = $region25
    $region24: #{tpu_custom_call.1} parent=1 // pred_region
      %53 = dma.done [#allocation6], 16
    $region25: #{tpu_custom_call.1} parent=1 // pred_fallthru
      _
    %v54 = vld [vmem:[#allocation2] sm:$0xff]
    %v55 = vlaneseq
    %v56 = vshrl.u32 %v55, 7
    %v57 = vsub.s32 0, %v56
    %v58 = vrot.slane %v54, %v57
    %v59 = vsub.f32 %v54, %v58
    %v60 = vrot.slane %v59, 4
    %v61 = vadd.f32 %v59, %v60
    %v62 = vrot.slane %v61, 2
    %v63 = vadd.f32 %v61, %v62
    %v64 = vrot.slane %v63, 1
    %v65 = vadd.f32 %v63, %v64
    %v66 = vmul.f32 %v65, 0.125
    %v67 = vmul.f32 %v59, %v59
    %v68 = vrot.slane %v67, 4
    %v69 = vadd.f32 %v67, %v68
    %v70 = vrot.slane %v69, 2
    %v71 = vadd.f32 %v69, %v70
    %v72 = vrot.slane %v71, 1
    %v73 = vadd.f32 %v71, %v72
    %v74 = vmul.f32 %v73, 0.125
    %v75 = vmul.f32 %v66, %v66
    %v76 = vsub.f32 %v74, %v75
    %v77 = vmax.f32 %v76, 0.0
    %v78 = vadd.f32 %v77, 1e-05
    %v79 = vrsqrt.pop %v78
    %v80 = vld [vmem:[#allocation5] sm:$0x1]
    %v81 = vmul.f32 %v79, %v80
    %v82 = vld [vmem:[#allocation7] sm:$0x1]
    %v83 = vmul.f32 %v66, %v81
    %v84 = vsub.f32 %v82, %v83
    %v85 = vlaneseq
    %v86 = vshrl.u32 %v85, 7
    %v87 = vsub.s32 0, %v86
    %v88 = vrot.slane %v81, %v87
    %v89 = vmul.f32 %v59, %v88
    %v91 = vlaneseq
    %v92 = vshrl.u32 %v91, 7
    %v93 = vsub.s32 0, %v92
    %v94 = vrot.slane %v84, %v93
    %v96 = vadd.f32 %v89, %v94
    %97 = vst [vmem:[#allocation8] sm:$0xff] %v96
    %v98 = vadd.f32 %v66, %v54
    %99 = vst [vmem:[#allocation9] sm:$0x1] %v98
    %100 = vst [vmem:[#allocation11] sm:$0x1] %v77
    // Predicated region
    $region26: #{tpu_custom_call.1} parent=1 // pred_check
      _
    $region27: #{tpu_custom_call.1} parent=1 // pred_check_branch
      %102 = sbr.rel (0) target = $region29
    $region28: #{tpu_custom_call.1} parent=1 // pred_region
      %s104 = ssub.s32 128, 128
      %105 = vsyncadd [#allocation4], %s104
      %s107 = sshll.u32 [#allocation8], 4
      %s108 = int_to_ptr.vmem [resolvable:$true] %s107
      %110 = dma.vmem_to_hbm [thread:$0]  %s108, 128, %s3, [#allocation4]
    $region29: #{tpu_custom_call.1} parent=1 // pred_fallthru
      _
    // Predicated region
    $region30: #{tpu_custom_call.1} parent=1 // pred_check
      _
    $region31: #{tpu_custom_call.1} parent=1 // pred_check_branch
      %112 = sbr.rel (0) target = $region33
    $region32: #{tpu_custom_call.1} parent=1 // pred_region
      %s114 = ssub.s32 16, 16
      %115 = vsyncadd [#allocation10], %s114
      %s117 = sshll.u32 [#allocation9], 4
      %s118 = int_to_ptr.vmem [resolvable:$true] %s117
      %120 = dma.vmem_to_hbm [thread:$0]  %s118, 16, %s4, [#allocation10]
    $region33: #{tpu_custom_call.1} parent=1 // pred_fallthru
      _
    // Predicated region
    $region34: #{tpu_custom_call.1} parent=1 // pred_check
      _
    $region35: #{tpu_custom_call.1} parent=1 // pred_check_branch
      %122 = sbr.rel (0) target = $region37
    $region36: #{tpu_custom_call.1} parent=1 // pred_region
      %s124 = ssub.s32 16, 16
      %125 = vsyncadd [#allocation10], %s124
      %s127 = sshll.u32 [#allocation11], 4
      %s128 = int_to_ptr.vmem [resolvable:$true] %s127
      %130 = dma.vmem_to_hbm [thread:$0]  %s128, 16, %s5, [#allocation10]
    $region37: #{tpu_custom_call.1} parent=1 // pred_fallthru
      _
    // Predicated region
    $region38: #{tpu_custom_call.1} parent=1 // pred_check
      _
    $region39: #{tpu_custom_call.1} parent=1 // pred_check_branch
      %132 = sbr.rel (0) target = $region41
    $region40: #{tpu_custom_call.1} parent=1 // pred_region
      %133 = dma.done [#allocation4], 128
    $region41: #{tpu_custom_call.1} parent=1 // pred_fallthru
      _
    // Predicated region
    $region42: #{tpu_custom_call.1} parent=1 // pred_check
      _
    $region43: #{tpu_custom_call.1} parent=1 // pred_check_branch
      %135 = sbr.rel (0) target = $region45
    $region44: #{tpu_custom_call.1} parent=1 // pred_region
      %136 = dma.done [#allocation10], 16
    $region45: #{tpu_custom_call.1} parent=1 // pred_fallthru
      _
    // Predicated region
    $region46: #{tpu_custom_call.1} parent=1 // pred_check
      _
    $region47: #{tpu_custom_call.1} parent=1 // pred_check_branch
      %138 = sbr.rel (0) target = $region49
    $region48: #{tpu_custom_call.1} parent=1 // pred_region
      %139 = dma.done [#allocation10], 16
    $region49: #{tpu_custom_call.1} parent=1 // pred_fallthru
      _
    %140 = vsyncpa [#allocation3], 1
    %141 = vsyncpa [#allocation6], 1
    %142 = vsyncpa [#allocation4], 1
    %143 = vsyncpa [#allocation10], 1

</llo_original>
